<compile_context>
chip_gen: v5e
topology: v5e:2x2
jax: 0.10.0
libtpu: 0.0.40
codegen_flags: <defaults>
</compile_context>

<pallas_src>
import math
from functools import partial

import jax
import jax.numpy as jnp
from jax.experimental import pallas as pl
from jax.experimental.pallas import tpu as pltpu


def make_positional_encoding(max_len, d_model, dtype=jnp.float32):
    """Replicates the PyTorch registered buffer (built once at init time)."""
    position = jnp.arange(max_len, dtype=jnp.float32)[:, None]
    div_term = jnp.exp(
        jnp.arange(0, d_model, 2, dtype=jnp.float32) * (-math.log(10000.0) / d_model)
    )
    ang = position * div_term  # (max_len, ceil(d_model / 2))
    pe = jnp.zeros((max_len, d_model), jnp.float32)
    pe = pe.at[:, 0::2].set(jnp.sin(ang))
    if d_model % 2 != 0:
        pe = pe.at[:, 1::2].set(jnp.cos(ang)[:, :-1])
    else:
        pe = pe.at[:, 1::2].set(jnp.cos(ang))
    return pe.astype(dtype)


def _hash_u32(x):
    """lowbias32 integer hash — pure VPU integer ops, portable everywhere."""
    x = x ^ (x >> 16)
    x = x * jnp.uint32(0x7FEB352D)
    x = x ^ (x >> 15)
    x = x * jnp.uint32(0x846CA68B)
    x = x ^ (x >> 16)
    return x


def _choose_tile(S, BD, itemsize, vmem_budget=20 * 1024 * 1024):
    """Largest sequence tile whose double-buffered x+pe+out blocks fit the budget.

    Budget is kept well under v7x's 32 MiB default scoped VMEM limit (and far
    under v5e/v6e), so no vmem_limit override is needed.
    """
    per_row = 3 * 2 * BD * itemsize  # x + pe + out, double-buffered
    ts_max = max(8, vmem_budget // per_row)
    if S <= ts_max:
        return S, 1                      # single block: no grid overhead
    ts = (ts_max // 8) * 8               # sublane-aligned
    steps = -(-S // ts)
    if steps % 2 == 1:                   # balance v7x's two TensorCores
        steps += 1
        ts = max(8, ((-(-S // steps) + 7) // 8) * 8)
        steps = -(-S // ts)
    return ts, steps


def _posenc_kernel(key_ref, x_ref, pe_ref, o_ref, *, ts, bd,
                   drop_threshold, keep_scale, apply_dropout):
    """Fused (x + pe) [+ inverted dropout] on one (TS, B*D) tile.

    key_ref: (1,) int32 in SMEM (scalar prefetch; pre-hashed seed)
    x_ref  : (TS, B*D)
    pe_ref : (TS, B*D)   -- pre-tiled over batch, same dtype as x
    o_ref  : (TS, B*D)
    """
    y = x_ref[...] + pe_ref[...]
    if apply_dropout:
        # Counter-based PRNG: hash(global_element_index XOR seed_key).
        rows = jax.lax.broadcasted_iota(jnp.int32, y.shape, 0)
        cols = jax.lax.broadcasted_iota(jnp.int32, y.shape, 1)
        row0 = pl.program_id(0) * ts
        state = (rows + row0) * bd + cols          # global id (wraps mod 2^32)
        state = state ^ key_ref[0]                 # mix in pre-hashed seed
        h = _hash_u32(state.astype(jnp.uint32))
        keep = h >= jnp.uint32(drop_threshold)     # P(drop) = threshold / 2^32 ≈ p
        y = jnp.where(keep, y * keep_scale, jnp.zeros_like(y))
    o_ref[...] = y.astype(o_ref.dtype)


def positional_encoding_forward(x, pe, *, p_drop=0.1, training=False, seed=0):
    """x: (S, B, D) (PyTorch seq-first convention).  pe: (max_len, D)."""
    S, B, D = x.shape
    BD = B * D
    itemsize = jnp.dtype(x.dtype).itemsize

    # Lane/sublane-dense 2-D view: last dim B*D on lanes, sequence on sublanes.
    x2 = x.reshape(S, BD)
    # pe pre-tiled over batch (init-time buffer in a real module) and cast to
    # the activation dtype -> in-kernel add is a straight vreg add.
    pe2 = jnp.tile(pe[:S].astype(x.dtype), (1, B))

    TS, steps = _choose_tile(S, BD, itemsize)
    grid = (steps,)
    sem = "parallel" if steps >= 2 else "arbitrary"

    apply_dropout = bool(training) and float(p_drop) > 0.0
    drop_threshold = min(int(round(float(p_drop) * (1 << 32))), (1 << 32) - 1)
    keep_scale = 1.0 / (1.0 - float(p_drop)) if apply_dropout else 1.0

    # Seed key: hashed in the wrapper (plain XLA ops) so streams never alias
    # across calls with nearby seeds; passed as an int32 SMEM prefetch scalar.
    seed_u = jnp.asarray(seed, jnp.uint32)
    key_u = _hash_u32(seed_u ^ jnp.uint32(0x9E3779B9))
    key_i32 = jax.lax.bitcast_convert_type(key_u, jnp.int32).reshape(1)

    kernel = partial(
        _posenc_kernel,
        ts=TS,
        bd=BD,
        drop_threshold=drop_threshold,
        keep_scale=keep_scale,
        apply_dropout=apply_dropout,
    )

    cost = pl.CostEstimate(
        flops=2 * S * BD,
        transcendentals=0,
        bytes_accessed=itemsize * 3 * S * BD,  # x read + pe read + out write
    )

    out2 = pl.pallas_call(
        kernel,
        out_shape=jax.ShapeDtypeStruct((S, BD), x.dtype),
        grid_spec=pltpu.PrefetchScalarGridSpec(
            num_scalar_prefetch=1,
            grid=grid,
            in_specs=[
                pl.BlockSpec((TS, BD), lambda i, key: (i, 0)),  # x
                pl.BlockSpec((TS, BD), lambda i, key: (i, 0)),  # pe (tiled)
            ],
            out_specs=pl.BlockSpec((TS, BD), lambda i, key: (i, 0)),
        ),
        compiler_params=pltpu.CompilerParams(dimension_semantics=(sem,)),
        cost_estimate=cost,
    )(key_i32, x2, pe2)

    return out2.reshape(S, B, D)


if __name__ == "__main__":
    # Small shapes consistent with the module: seq=16, batch=2, d_model=128.
    S, B, D = 16, 2, 128
    MAX_LEN, P_DROP = 64, 0.1

    key = jax.random.PRNGKey(0)
    x = jax.random.normal(key, (S, B, D), jnp.float32)
    pe = make_positional_encoding(MAX_LEN, D)

    # --- eval mode (dropout = identity): exact check vs pure-JAX reference ---
    out = positional_encoding_forward(x, pe, p_drop=P_DROP, training=False)
    out = jax.block_until_ready(out)
    ref = x + pe[:S][:, None, :]
    assert out.shape == (S, B, D), (out.shape, (S, B, D))
    assert jnp.allclose(out, ref, atol=1e-6, rtol=1e-6), "eval-mode mismatch"

    # --- training mode: in-kernel inverted dropout sanity check -------------
    out_tr = jax.block_until_ready(
        positional_encoding_forward(x, pe, p_drop=P_DROP, training=True, seed=123)
    )
    scaled = ref * (1.0 / (1.0 - P_DROP))
    # every element is either dropped (0) or kept & rescaled
    ok = jnp.minimum(jnp.abs(out_tr), jnp.abs(out_tr - scaled)) < 1e-5
    assert bool(jnp.all(ok)), "training-mode elements not in {0, (x+pe)/(1-p)}"
    drop_frac = float(jnp.mean((out_tr == 0.0).astype(jnp.float32)))
    assert 0.01 < drop_frac < 0.3, f"unexpected drop fraction {drop_frac}"

    print("KERNEL_OK")
</pallas_src>

<mosaic_0001>
module attributes {stable_mosaic.version = 11 : i64} {
  func.func @_posenc_kernel(%arg0: i32, %arg1: memref<1xi32, #tpu.memory_space<smem>>, %arg2: memref<16x256xf32, #tpu.memory_space<vmem>>, %arg3: memref<16x256xf32, #tpu.memory_space<vmem>>, %arg4: memref<16x256xf32, #tpu.memory_space<vmem>>) attributes {dimension_semantics = [#tpu.dimension_semantics<arbitrary>], iteration_bounds = array<i64: 1>, scalar_prefetch = 1 : i64, scratch_operands = 0 : i64, tpu.core_type = #tpu.core_type<tc>, window_params = [{transform_indices = @transform_0, window_bounds = array<i64: 16, 256>}, {transform_indices = @transform_1, window_bounds = array<i64: 16, 256>}, {transform_indices = @transform_2, window_bounds = array<i64: 16, 256>}]} {
    %c0 = arith.constant 0 : index
    %c0_0 = arith.constant 0 : index
    %0 = vector.load %arg2[%c0, %c0_0] : memref<16x256xf32, #tpu.memory_space<vmem>>, vector<16x256xf32>
    %c0_1 = arith.constant 0 : index
    %c0_2 = arith.constant 0 : index
    %1 = vector.load %arg3[%c0_1, %c0_2] : memref<16x256xf32, #tpu.memory_space<vmem>>, vector<16x256xf32>
    %2 = arith.addf %0, %1 : vector<16x256xf32>
    %c0_3 = arith.constant 0 : index
    %c0_4 = arith.constant 0 : index
    %3 = vector.load %arg4[%c0_3, %c0_4] : memref<16x256xf32, #tpu.memory_space<vmem>>, vector<16x256xf32>
    tpu.vector_store %arg4[%c0_3, %c0_4], %2 {strides = array<i32>} : memref<16x256xf32, #tpu.memory_space<vmem>>, vector<16x256xf32>,
    return
  }
  func.func @transform_0(%arg0: i32, %arg1: memref<1xi32, #tpu.memory_space<smem>>) -> (i32, i32) {
    %c0_i32 = arith.constant 0 : i32
    %c0_i32_0 = arith.constant 0 : i32
    return %arg0, %c0_i32 : i32, i32
  }
  func.func @transform_1(%arg0: i32, %arg1: memref<1xi32, #tpu.memory_space<smem>>) -> (i32, i32) {
    %c0_i32 = arith.constant 0 : i32
    %c0_i32_0 = arith.constant 0 : i32
    return %arg0, %c0_i32 : i32, i32
  }
  func.func @transform_2(%arg0: i32, %arg1: memref<1xi32, #tpu.memory_space<smem>>) -> (i32, i32) {
    %c0_i32 = arith.constant 0 : i32
    %c0_i32_0 = arith.constant 0 : i32
    return %arg0, %c0_i32 : i32, i32
  }
}

</mosaic_0001>

<llo_original>
// kernel: tpu_custom_call.1
$region0: #{tpu_custom_call.1}
  #allocation0 [shape = 'u32[]', space=smem, size = 0x4, offset = 0x4, fixed_abs, tag = 'smem constant byte address 0x4 - core index']
  #allocation1 [shape = 'u32[72,128]{1,0:T(1,128)}', space=vmem, size = 0x9000, scoped, tag = 'internal scratch']
  #allocation2 [shape = 's32[1]{0}', space=sflag, size = 0x4, scoped, tag = 'scoped memory for tpu_custom_call.1']
  #allocation3 [shape = 's32[1]{0:T(128)S(6)}', space=smem, size = 0x200, scoped, tag = 'prefetched SMEM operand 0']
  %s0 = inlined_call_operand.<no memory space> [shape: s32[1], index: 0, kind: input, shape index: {}]
  %s1 = inlined_call_operand.hbm [shape: f32[16,256], index: 1, kind: input, shape index: {}]
  %s2 = inlined_call_operand.hbm [shape: f32[16,256], index: 2, kind: input, shape index: {}]
  %s3 = inlined_call_operand.hbm [shape: f32[16,256], index: 3, kind: output, shape index: {}]
  %s4 = sld [smem:[#allocation0]]
  $region26: #{tpu_custom_call.1} parent=0
    _
  %s6 = ssub.s32 1, %s4
  %s7 = scalar_select 0, %s6, %s4
  %8 = sst [smem:[#allocation3]] %s0
  $region1: #{tpu_custom_call.1} parent=0
    #allocation4 [shape = 'u8[16384]{0}', space=vmem, size = 0x4000, scoped, tag = 'input window, operand 1, single buffered']
    #allocation5 [shape = 's32[1]{0}', space=sflag, size = 0x4, scoped, tag = 'scoped memory for tpu_custom_call.1']
    #allocation6 [shape = 's32[1]{0}', space=sflag, size = 0x4, scoped, tag = 'scoped memory for tpu_custom_call.1']
    #allocation7 [shape = 'u8[16384]{0}', space=vmem, size = 0x4000, scoped, tag = 'input window, operand 2, single buffered']
    #allocation8 [shape = 's32[1]{0}', space=sflag, size = 0x4, scoped, tag = 'scoped memory for tpu_custom_call.1']
    #allocation9 [shape = 'u8[16384]{0}', space=vmem, size = 0x4000, scoped, tag = 'output window, operand 0, single buffered']
    %9 = vsyncpa [#allocation5], 0
    %10 = vsyncpa [#allocation8], 0
    %11 = vsyncpa [#allocation6], 0
    // Predicated region
    $region2: #{tpu_custom_call.1} parent=1 // pred_check
      _
    $region3: #{tpu_custom_call.1} parent=1 // pred_check_branch
      %13 = sbr.rel (0) target = $region5
    $region4: #{tpu_custom_call.1} parent=1 // pred_region
      %15 = vsyncadd [#allocation5], 0
      %s16 = sshll.u32 %s1, 4
      %s17 = int_to_ptr.hbm [resolvable:$true] %s16
      %s18 = sshll.u32 [#allocation4], 4
      %s19 = int_to_ptr.vmem [resolvable:$true] %s18
      %24 = dma.hbm_to_vmem [thread:$0]  %s17, 512, %s19, [#allocation5], 256, 256, 16
    $region5: #{tpu_custom_call.1} parent=1 // pred_fallthru
      _
    // Predicated region
    $region6: #{tpu_custom_call.1} parent=1 // pred_check
      _
    $region7: #{tpu_custom_call.1} parent=1 // pred_check_branch
      %26 = sbr.rel (0) target = $region9
    $region8: #{tpu_custom_call.1} parent=1 // pred_region
      %28 = vsyncadd [#allocation8], 0
      %s29 = sshll.u32 %s2, 4
      %s30 = int_to_ptr.hbm [resolvable:$true] %s29
      %s31 = sshll.u32 [#allocation7], 4
      %s32 = int_to_ptr.vmem [resolvable:$true] %s31
      %37 = dma.hbm_to_vmem [thread:$0]  %s30, 512, %s32, [#allocation8], 256, 256, 16
    $region9: #{tpu_custom_call.1} parent=1 // pred_fallthru
      _
    // Predicated region
    $region10: #{tpu_custom_call.1} parent=1 // pred_check
      _
    $region11: #{tpu_custom_call.1} parent=1 // pred_check_branch
      %39 = sbr.rel (0) target = $region13
    $region12: #{tpu_custom_call.1} parent=1 // pred_region
      %41 = dma.done [#allocation5], 512
    $region13: #{tpu_custom_call.1} parent=1 // pred_fallthru
      _
    // Predicated region
    $region14: #{tpu_custom_call.1} parent=1 // pred_check
      _
    $region15: #{tpu_custom_call.1} parent=1 // pred_check_branch
      %43 = sbr.rel (0) target = $region17
    $region16: #{tpu_custom_call.1} parent=1 // pred_region
      %45 = dma.done [#allocation8], 512
    $region17: #{tpu_custom_call.1} parent=1 // pred_fallthru
      _
    %v46 = vld [vmem:[#allocation4] sm:$0xff]
    %v47 = vld [vmem:[#allocation4 + $0x8] sm:$0xff]
    %v48 = vld [vmem:[#allocation4 + $0x10] sm:$0xff]
    %v49 = vld [vmem:[#allocation4 + $0x18] sm:$0xff]
    %v50 = vld [vmem:[#allocation7] sm:$0xff]
    %v51 = vld [vmem:[#allocation7 + $0x8] sm:$0xff]
    %v52 = vld [vmem:[#allocation7 + $0x10] sm:$0xff]
    %v53 = vld [vmem:[#allocation7 + $0x18] sm:$0xff]
    %v54 = vadd.f32 %v46, %v50
    %v55 = vadd.f32 %v47, %v51
    %v56 = vadd.f32 %v48, %v52
    %v57 = vadd.f32 %v49, %v53
    %58 = vst [vmem:[#allocation9] sm:$0xff] %v54
    %59 = vst [vmem:[#allocation9 + $0x8] sm:$0xff] %v55
    %60 = vst [vmem:[#allocation9 + $0x10] sm:$0xff] %v56
    %61 = vst [vmem:[#allocation9 + $0x18] sm:$0xff] %v57
    // Predicated region
    $region18: #{tpu_custom_call.1} parent=1 // pred_check
      _
    $region19: #{tpu_custom_call.1} parent=1 // pred_check_branch
      %63 = sbr.rel (0) target = $region21
    $region20: #{tpu_custom_call.1} parent=1 // pred_region
      %65 = vsyncadd [#allocation6], 0
      %s66 = sshll.u32 [#allocation9], 4
      %s67 = int_to_ptr.vmem [resolvable:$true] %s66
      %s68 = sshll.u32 %s3, 4
      %s69 = int_to_ptr.hbm [resolvable:$true] %s68
      %74 = dma.vmem_to_hbm [thread:$0]  %s67, 512, %s69, [#allocation6], 256, 256, 16
    $region21: #{tpu_custom_call.1} parent=1 // pred_fallthru
      _
    // Predicated region
    $region22: #{tpu_custom_call.1} parent=1 // pred_check
      _
    $region23: #{tpu_custom_call.1} parent=1 // pred_check_branch
      %76 = sbr.rel (0) target = $region25
    $region24: #{tpu_custom_call.1} parent=1 // pred_region
      %78 = dma.done [#allocation6], 512
    $region25: #{tpu_custom_call.1} parent=1 // pred_fallthru
      _
    %79 = vsyncpa [#allocation5], 1
    %80 = vsyncpa [#allocation8], 1
    %81 = vsyncpa [#allocation6], 1

</llo_original>
